<compile_context>
chip_gen: v7x
topology: tpu7x:2x2x1
jax: 0.10.0
libtpu: 0.0.40
codegen_flags: <defaults>
</compile_context>

<pallas_src>
import functools

import jax
import jax.numpy as jnp
from jax.experimental import pallas as pl
from jax.experimental.pallas import tpu as pltpu


def _mlp_kernel(xT_ref, w1_ref, b1_ref, w2_ref, b2_ref, w3_ref, b3_ref, oT_ref,
                *, mxu_dtype):
    # Layer 1: h1 = silu(W1 @ xT + b1)                      -> [h1, block_b]
    h = jnp.dot(w1_ref[...], xT_ref[...], preferred_element_type=jnp.float32)
    h = h + b1_ref[...]                  # [h1, 1] broadcasts across lanes
    h = h * jax.nn.sigmoid(h)            # SiLU in f32 (EUP sigmoid + VPU mul)
    # Dropout -> identity at inference.

    # Layer 2: h2 = silu(W2 @ h1 + b2)                      -> [h2, block_b]
    h = jnp.dot(w2_ref[...], h.astype(mxu_dtype),
                preferred_element_type=jnp.float32)
    h = h + b2_ref[...]
    h = h * jax.nn.sigmoid(h)
    # Dropout -> identity at inference.

    # Output layer: o = W3 @ h2 + b3                        -> [d_out, block_b]
    o = jnp.dot(w3_ref[...], h.astype(mxu_dtype),
                preferred_element_type=jnp.float32)
    oT_ref[...] = (o + b3_ref[...]).astype(oT_ref.dtype)    # lane-dense store


@functools.partial(jax.jit, static_argnames=("block_b", "mxu_dtype"))
def mlp_forward(x, w1, b1, w2, b2, w3, b3, *, block_b=256, mxu_dtype=jnp.bfloat16):
    """Fused MLP forward.

    x : [B, d_in] float32
    wN: [out, in]  (PyTorch nn.Linear layout),  bN: [out]
    Returns [B, d_out] float32.
    """
    B, d_in = x.shape
    h1, h2, d_out = w1.shape[0], w2.shape[0], w3.shape[0]

    # Ragged batches: pad up to a multiple of the tile, slice off at the end.
    n_tiles = pl.cdiv(B, block_b)
    B_pad = n_tiles * block_b
    if B_pad != B:
        x = jnp.pad(x, ((0, B_pad - B), (0, 0)))

    # Batch on the lane axis: activations are [features, batch].
    xT = x.T.astype(mxu_dtype)                               # [d_in, B_pad]
    w1c, w2c, w3c = (w.astype(mxu_dtype) for w in (w1, w2, w3))
    b1c = b1.reshape(h1, 1).astype(jnp.float32)
    b2c = b2.reshape(h2, 1).astype(jnp.float32)
    b3c = b3.reshape(d_out, 1).astype(jnp.float32)

    # Weights/biases are tiny and have a constant index_map: keep one resident
    # copy in VMEM instead of double-buffering it every grid step.
    def resident(shape):
        return pl.BlockSpec(shape, lambda i: (0, 0), pipeline_mode=pl.Buffered(1))

    flops = 2 * B_pad * (d_in * h1 + h1 * h2 + h2 * d_out)
    transcendentals = B_pad * (h1 + h2)                      # two sigmoids per row
    bytes_accessed = (xT.size * xT.dtype.itemsize
                      + sum(a.size * a.dtype.itemsize
                            for a in (w1c, w2c, w3c, b1c, b2c, b3c))
                      + B_pad * d_out * 4)

    # Explicit VMEM budget (re-derived for v7x's 64 MiB): double-buffered x/out
    # tiles + one resident copy of the parameters, with generous headroom.
    itm = jnp.dtype(mxu_dtype).itemsize
    vmem_needed = (2 * block_b * (d_in * itm + d_out * 4)
                   + (d_in * h1 + h1 * h2 + h2 * d_out) * itm
                   + (h1 + h2 + d_out) * 4)
    vmem_limit = int(min(max(4 * vmem_needed, 16 * 1024 * 1024), 40 * 1024 * 1024))

    oT = pl.pallas_call(
        functools.partial(_mlp_kernel, mxu_dtype=mxu_dtype),
        out_shape=jax.ShapeDtypeStruct((d_out, B_pad), jnp.float32),
        grid_spec=pltpu.PrefetchScalarGridSpec(
            num_scalar_prefetch=0,
            grid=(n_tiles,),
            in_specs=[
                pl.BlockSpec((d_in, block_b), lambda i: (0, i)),   # x tile
                resident((h1, d_in)),  resident((h1, 1)),          # layer 1
                resident((h2, h1)),    resident((h2, 1)),          # layer 2
                resident((d_out, h2)), resident((d_out, 1)),       # output layer
            ],
            out_specs=pl.BlockSpec((d_out, block_b), lambda i: (0, i)),
        ),
        compiler_params=pltpu.CompilerParams(
            dimension_semantics=("parallel",),    # batch tiles shard across TCs
            vmem_limit_bytes=vmem_limit,
        ),
        cost_estimate=pl.CostEstimate(
            flops=flops,
            transcendentals=transcendentals,
            bytes_accessed=bytes_accessed,
        ),
    )(xT, w1c, b1c, w2c, b2c, w3c, b3c)

    return oT.T[:B]                                           # back to [B, d_out]


def init_linear(key, fan_in, fan_out):
    """PyTorch nn.Linear default init: U(-1/sqrt(fan_in), 1/sqrt(fan_in))."""
    kw, kb = jax.random.split(key)
    bound = 1.0 / jnp.sqrt(jnp.float32(fan_in))
    w = jax.random.uniform(kw, (fan_out, fan_in), jnp.float32, -bound, bound)
    b = jax.random.uniform(kb, (fan_out,), jnp.float32, -bound, bound)
    return w, b


def mlp_reference(x, w1, b1, w2, b2, w3, b3):
    silu = lambda t: t * jax.nn.sigmoid(t)
    h = silu(x @ w1.T + b1)
    h = silu(h @ w2.T + b2)
    return h @ w3.T + b3


if __name__ == "__main__":
    # Module config: MLP(input_size=8, output_size=4, hidden_layers=[16, 16],
    #                    activation='silu', dropout_prob=0.2), eval mode.
    input_size, output_size = 8, 4
    hidden_layers = [16, 16]
    batch, block_b = 512, 256        # grid = (2,) -> both v7x TensorCores busy

    key = jax.random.PRNGKey(0)
    kx, k1, k2, k3 = jax.random.split(key, 4)

    x = jax.random.normal(kx, (batch, input_size), jnp.float32)
    w1, b1 = init_linear(k1, input_size, hidden_layers[0])
    w2, b2 = init_linear(k2, hidden_layers[0], hidden_layers[1])
    w3, b3 = init_linear(k3, hidden_layers[1], output_size)

    ref = mlp_reference(x, w1, b1, w2, b2, w3, b3)

    # Exactness check with f32 MXU inputs.
    out_f32 = jax.block_until_ready(
        mlp_forward(x, w1, b1, w2, b2, w3, b3,
                    block_b=block_b, mxu_dtype=jnp.float32))
    assert out_f32.shape == (batch, output_size)
    assert jnp.allclose(out_f32, ref, atol=1e-4, rtol=1e-4), "f32 mismatch vs reference"

    # Default fast path: bf16 MXU inputs, f32 accumulation + f32 elementwise.
    out = jax.block_until_ready(
        mlp_forward(x, w1, b1, w2, b2, w3, b3,
                    block_b=block_b, mxu_dtype=jnp.bfloat16))
    assert out.shape == (batch, output_size)
    assert jnp.allclose(out, ref, atol=3e-2, rtol=5e-2), "bf16 mismatch vs reference"

    print("KERNEL_OK")
</pallas_src>

<mosaic_0001>
module attributes {stable_mosaic.version = 11 : i64} {
  func.func @_mlp_kernel(%arg0: i32, %arg1: memref<8x256xf32, #tpu.memory_space<vmem>>, %arg2: memref<16x8xf32, #tpu.memory_space<vmem>>, %arg3: memref<16x1xf32, #tpu.memory_space<vmem>>, %arg4: memref<16x16xf32, #tpu.memory_space<vmem>>, %arg5: memref<16x1xf32, #tpu.memory_space<vmem>>, %arg6: memref<4x16xf32, #tpu.memory_space<vmem>>, %arg7: memref<4x1xf32, #tpu.memory_space<vmem>>, %arg8: memref<4x256xf32, #tpu.memory_space<vmem>>) attributes {dimension_semantics = [#tpu.dimension_semantics<parallel>], iteration_bounds = array<i64: 2>, scalar_prefetch = 0 : i64, scratch_operands = 0 : i64, tpu.core_type = #tpu.core_type<tc>, window_params = [{transform_indices = @transform_0, window_bounds = array<i64: 8, 256>}, {pipeline_mode = #tpu.pipeline_mode<synchronous>, transform_indices = @transform_1, window_bounds = array<i64: 16, 8>}, {pipeline_mode = #tpu.pipeline_mode<synchronous>, transform_indices = @transform_2, window_bounds = array<i64: 16, 1>}, {pipeline_mode = #tpu.pipeline_mode<synchronous>, transform_indices = @transform_3, window_bounds = array<i64: 16, 16>}, {pipeline_mode = #tpu.pipeline_mode<synchronous>, transform_indices = @transform_4, window_bounds = array<i64: 16, 1>}, {pipeline_mode = #tpu.pipeline_mode<synchronous>, transform_indices = @transform_5, window_bounds = array<i64: 4, 16>}, {pipeline_mode = #tpu.pipeline_mode<synchronous>, transform_indices = @transform_6, window_bounds = array<i64: 4, 1>}, {transform_indices = @transform_7, window_bounds = array<i64: 4, 256>}]} {
    %c0 = arith.constant 0 : index
    %c0_0 = arith.constant 0 : index
    %0 = vector.load %arg2[%c0, %c0_0] : memref<16x8xf32, #tpu.memory_space<vmem>>, vector<16x8xf32>
    %c0_1 = arith.constant 0 : index
    %c0_2 = arith.constant 0 : index
    %1 = vector.load %arg1[%c0_1, %c0_2] : memref<8x256xf32, #tpu.memory_space<vmem>>, vector<8x256xf32>
    %cst = arith.constant dense<0.000000e+00> : vector<16x256xf32>
    %2 = tpu.matmul %0, %1, %cst {dimension_numbers = #tpu.dot_dimension_numbers<[1], [0], [0], [1], [0, 0, 1, 1], [], []>} : vector<16x8xf32>, vector<8x256xf32>, vector<16x256xf32> -> vector<16x256xf32>
    %c0_3 = arith.constant 0 : index
    %c0_4 = arith.constant 0 : index
    %3 = vector.load %arg3[%c0_3, %c0_4] : memref<16x1xf32, #tpu.memory_space<vmem>>, vector<16x1xf32>
    %4 = vector.broadcast %3 : vector<16x1xf32> to vector<16x256xf32>
    %5 = arith.addf %2, %4 : vector<16x256xf32>
    %6 = arith.negf %5 : vector<16x256xf32>
    %7 = math.exp %6 : vector<16x256xf32>
    %cst_5 = arith.constant 1.000000e+00 : f32
    %8 = vector.broadcast %cst_5 : f32 to vector<16x256xf32>
    %9 = arith.addf %8, %7 : vector<16x256xf32>
    %10 = arith.divf %8, %9 : vector<16x256xf32>
    %11 = arith.mulf %5, %10 : vector<16x256xf32>
    %c0_6 = arith.constant 0 : index
    %c0_7 = arith.constant 0 : index
    %12 = vector.load %arg4[%c0_6, %c0_7] : memref<16x16xf32, #tpu.memory_space<vmem>>, vector<16x16xf32>
    %cst_8 = arith.constant dense<0.000000e+00> : vector<16x256xf32>
    %13 = tpu.matmul %12, %11, %cst_8 {dimension_numbers = #tpu.dot_dimension_numbers<[1], [0], [0], [1], [0, 0, 1, 1], [], []>} : vector<16x16xf32>, vector<16x256xf32>, vector<16x256xf32> -> vector<16x256xf32>
    %c0_9 = arith.constant 0 : index
    %c0_10 = arith.constant 0 : index
    %14 = vector.load %arg5[%c0_9, %c0_10] : memref<16x1xf32, #tpu.memory_space<vmem>>, vector<16x1xf32>
    %15 = vector.broadcast %14 : vector<16x1xf32> to vector<16x256xf32>
    %16 = arith.addf %13, %15 : vector<16x256xf32>
    %17 = arith.negf %16 : vector<16x256xf32>
    %18 = math.exp %17 : vector<16x256xf32>
    %cst_11 = arith.constant 1.000000e+00 : f32
    %19 = vector.broadcast %cst_11 : f32 to vector<16x256xf32>
    %20 = arith.addf %19, %18 : vector<16x256xf32>
    %21 = arith.divf %19, %20 : vector<16x256xf32>
    %22 = arith.mulf %16, %21 : vector<16x256xf32>
    %c0_12 = arith.constant 0 : index
    %c0_13 = arith.constant 0 : index
    %23 = vector.load %arg6[%c0_12, %c0_13] : memref<4x16xf32, #tpu.memory_space<vmem>>, vector<4x16xf32>
    %cst_14 = arith.constant dense<0.000000e+00> : vector<4x256xf32>
    %24 = tpu.matmul %23, %22, %cst_14 {dimension_numbers = #tpu.dot_dimension_numbers<[1], [0], [0], [1], [0, 0, 1, 1], [], []>} : vector<4x16xf32>, vector<16x256xf32>, vector<4x256xf32> -> vector<4x256xf32>
    %c0_15 = arith.constant 0 : index
    %c0_16 = arith.constant 0 : index
    %25 = vector.load %arg7[%c0_15, %c0_16] : memref<4x1xf32, #tpu.memory_space<vmem>>, vector<4x1xf32>
    %26 = vector.broadcast %25 : vector<4x1xf32> to vector<4x256xf32>
    %27 = arith.addf %24, %26 : vector<4x256xf32>
    %c0_17 = arith.constant 0 : index
    %c0_18 = arith.constant 0 : index
    %28 = vector.load %arg8[%c0_17, %c0_18] : memref<4x256xf32, #tpu.memory_space<vmem>>, vector<4x256xf32>
    tpu.vector_store %arg8[%c0_17, %c0_18], %27 {strides = array<i32>} : memref<4x256xf32, #tpu.memory_space<vmem>>, vector<4x256xf32>,
    return
  }
  func.func @transform_0(%arg0: i32) -> (i32, i32) {
    %c0_i32 = arith.constant 0 : i32
    %c0_i32_0 = arith.constant 0 : i32
    return %c0_i32, %arg0 : i32, i32
  }
  func.func @transform_1(%arg0: i32) -> (i32, i32) {
    %c0_i32 = arith.constant 0 : i32
    %c0_i32_0 = arith.constant 0 : i32
    %c0_i32_1 = arith.constant 0 : i32
    return %c0_i32, %c0_i32_0 : i32, i32
  }
  func.func @transform_2(%arg0: i32) -> (i32, i32) {
    %c0_i32 = arith.constant 0 : i32
    %c0_i32_0 = arith.constant 0 : i32
    %c0_i32_1 = arith.constant 0 : i32
    return %c0_i32, %c0_i32_0 : i32, i32
  }
  func.func @transform_3(%arg0: i32) -> (i32, i32) {
    %c0_i32 = arith.constant 0 : i32
    %c0_i32_0 = arith.constant 0 : i32
    %c0_i32_1 = arith.constant 0 : i32
    return %c0_i32, %c0_i32_0 : i32, i32
  }
  func.func @transform_4(%arg0: i32) -> (i32, i32) {
    %c0_i32 = arith.constant 0 : i32
    %c0_i32_0 = arith.constant 0 : i32
    %c0_i32_1 = arith.constant 0 : i32
    return %c0_i32, %c0_i32_0 : i32, i32
  }
  func.func @transform_5(%arg0: i32) -> (i32, i32) {
    %c0_i32 = arith.constant 0 : i32
    %c0_i32_0 = arith.constant 0 : i32
    %c0_i32_1 = arith.constant 0 : i32
    return %c0_i32, %c0_i32_0 : i32, i32
  }
  func.func @transform_6(%arg0: i32) -> (i32, i32) {
    %c0_i32 = arith.constant 0 : i32
    %c0_i32_0 = arith.constant 0 : i32
    %c0_i32_1 = arith.constant 0 : i32
    return %c0_i32, %c0_i32_0 : i32, i32
  }
  func.func @transform_7(%arg0: i32) -> (i32, i32) {
    %c0_i32 = arith.constant 0 : i32
    %c0_i32_0 = arith.constant 0 : i32
    return %c0_i32, %arg0 : i32, i32
  }
}

</mosaic_0001>

<llo_original>
// kernel: mlp_forward.1
$region0: #{mlp_forward.1}
  #allocation0 [shape = 'u32[]', space=smem, size = 0x4, offset = 0x4, fixed_abs, tag = 'smem constant byte address 0x4 - core index']
  #allocation1 [shape = 'u32[144,128]{1,0:T(1,128)}', space=vmem, size = 0x12000, scoped, tag = 'internal scratch']
  %s0 = inlined_call_operand.vmem [shape: f32[8,512], index: 0, kind: input, shape index: {}]
  %s1 = inlined_call_operand.vmem [shape: f32[16,8], index: 1, kind: input, shape index: {}]
  %s2 = inlined_call_operand.vmem [shape: f32[16,1], index: 2, kind: input, shape index: {}]
  %s3 = inlined_call_operand.vmem [shape: f32[16,16], index: 3, kind: input, shape index: {}]
  %s4 = inlined_call_operand.vmem [shape: f32[16,1], index: 4, kind: input, shape index: {}]
  %s5 = inlined_call_operand.vmem [shape: f32[4,16], index: 5, kind: input, shape index: {}]
  %s6 = inlined_call_operand.vmem [shape: f32[4,1], index: 6, kind: input, shape index: {}]
  %s7 = inlined_call_operand.hbm [shape: f32[4,512], index: 7, kind: output, shape index: {}]
  %s8 = sld [smem:[#allocation0]]
  $region61: #{mlp_forward.1} parent=0
    _
  %s10 = ssub.s32 1, %s8
  %s11 = scalar_select 0, %s10, %s8
  $region1: #{mlp_forward.1} parent=0
    #allocation2 [shape = 'u8[8192]{0}', space=vmem, size = 0x2000, scoped, tag = 'output window, operand 0']
    #allocation3 [shape = 's32[2]{0}', space=sflag, size = 0x8, scoped, tag = 'scoped memory for mlp_forward.1']
    %12 = vsyncpa [#allocation3], 0
    %s13 = scalar_lea.sflag [#allocation3], 1
    %14 = vsyncpa %s13, 0
    loop: start=0, step=1, limit=4
    $region2: #{mlp_forward.1} parent=1 // loop_pre_header
      _
    $region3: #{mlp_forward.1} parent=1 // loop_header
      %s16 = sphi 0, %s20
      %p17 = scmp.ge.s32.totalorder %s16, 4
      %s26 = sphi 0, %s28
      %s29 = sphi 0, %s26
      %s30 = sphi 0, %s29
      %s46 = sphi 0, %s30
      %s50 = sphi 0, %s50
      %s52 = sphi 0, %s50
      %s53 = sphi 0, %s52
      %s67 = sphi 0, %s53
      %s71 = sphi 0, %s71
      %s73 = sphi 0, %s71
      %s74 = sphi 0, %s73
      %s88 = sphi 0, %s74
      %s92 = sphi 0, %s92
      %s94 = sphi 0, %s92
      %s95 = sphi 0, %s94
      %s109 = sphi 0, %s95
      %s113 = sphi 0, %s113
      %s115 = sphi 0, %s113
      %s116 = sphi 0, %s115
      %s130 = sphi 0, %s116
      %s134 = sphi 0, %s134
      %s136 = sphi 0, %s134
      %s137 = sphi 0, %s136
      %s151 = sphi 0, %s137
      %s155 = sphi 0, %s155
      %s157 = sphi 0, %s155
      %s158 = sphi 0, %s157
      %s172 = sphi 0, %s158
      %s178 = sphi 0, %s180
      %s181 = sphi 0, %s178
      %s182 = sphi 0, %s181
      %s198 = sphi 0, %s182
    $region4: #{mlp_forward.1} parent=1 // loop_header_branch
      %19 = sbr.rel (%p17) target = $region8
    $region5: #{mlp_forward.1} parent=1 // loop_body
      %s21 = ssub.s32 %s16, 1
      %s22 = ssub.s32 %s16, 2
      %s23 = sadd.s32 %s16, 1
      %s24 = ssub.s32 %s16, %s23
      %p25 = scmp.eq.s32.totalorder %s24, 0
      %s27 = sadd.s32 %s26, 1
      %s28 = scalar_select %p25, %s26, %s27
      %p31 = pneg %p25
      %p32 = scmp.eq.s32.totalorder %s16, 1
      %p33 = por %p31, %p32
      %p34 = scmp.ne.s32.totalorder %s26, %s29
      %p35 = scmp.eq.s32.totalorder %s16, 0
      %p36 = por %p34, %p35
      %p37 = scmp.ne.s32.totalorder %s26, %s29
      %p38 = scmp.eq.s32.totalorder %s21, 1
      %p39 = por %p37, %p38
      %p40 = scmp.ne.s32.totalorder %s29, %s30
      %p41 = scmp.eq.s32.totalorder %s21, 0
      %p42 = por %p40, %p41
      %p43 = scmp.ne.s32.totalorder %s29, %s30
      %p44 = scmp.eq.s32.totalorder %s22, 1
      %p45 = por %p43, %p44
      %p47 = scmp.ne.s32.totalorder %s30, %s46
      %p48 = scmp.eq.s32.totalorder %s22, 0
      %p49 = por %p47, %p48
      %s51 = sadd.s32 %s50, 1
      %p54 = scmp.eq.s32.totalorder %s16, 1
      %p55 = scmp.ne.s32.totalorder %s50, %s52
      %p56 = scmp.eq.s32.totalorder %s16, 0
      %p57 = por %p55, %p56
      %p58 = scmp.ne.s32.totalorder %s50, %s52
      %p59 = scmp.eq.s32.totalorder %s21, 1
      %p60 = por %p58, %p59
      %p61 = scmp.ne.s32.totalorder %s52, %s53
      %p62 = scmp.eq.s32.totalorder %s21, 0
      %p63 = por %p61, %p62
      %p64 = scmp.ne.s32.totalorder %s52, %s53
      %p65 = scmp.eq.s32.totalorder %s22, 1
      %p66 = por %p64, %p65
      %p68 = scmp.ne.s32.totalorder %s53, %s67
      %p69 = scmp.eq.s32.totalorder %s22, 0
      %p70 = por %p68, %p69
      %s72 = sadd.s32 %s71, 1
      %p75 = scmp.eq.s32.totalorder %s16, 1
      %p76 = scmp.ne.s32.totalorder %s71, %s73
      %p77 = scmp.eq.s32.totalorder %s16, 0
      %p78 = por %p76, %p77
      %p79 = scmp.ne.s32.totalorder %s71, %s73
      %p80 = scmp.eq.s32.totalorder %s21, 1
      %p81 = por %p79, %p80
      %p82 = scmp.ne.s32.totalorder %s73, %s74
      %p83 = scmp.eq.s32.totalorder %s21, 0
      %p84 = por %p82, %p83
      %p85 = scmp.ne.s32.totalorder %s73, %s74
      %p86 = scmp.eq.s32.totalorder %s22, 1
      %p87 = por %p85, %p86
      %p89 = scmp.ne.s32.totalorder %s74, %s88
      %p90 = scmp.eq.s32.totalorder %s22, 0
      %p91 = por %p89, %p90
      %s93 = sadd.s32 %s92, 1
      %p96 = scmp.eq.s32.totalorder %s16, 1
      %p97 = scmp.ne.s32.totalorder %s92, %s94
      %p98 = scmp.eq.s32.totalorder %s16, 0
      %p99 = por %p97, %p98
      %p100 = scmp.ne.s32.totalorder %s92, %s94
      %p101 = scmp.eq.s32.totalorder %s21, 1
      %p102 = por %p100, %p101
      %p103 = scmp.ne.s32.totalorder %s94, %s95
      %p104 = scmp.eq.s32.totalorder %s21, 0
      %p105 = por %p103, %p104
      %p106 = scmp.ne.s32.totalorder %s94, %s95
      %p107 = scmp.eq.s32.totalorder %s22, 1
      %p108 = por %p106, %p107
      %p110 = scmp.ne.s32.totalorder %s95, %s109
      %p111 = scmp.eq.s32.totalorder %s22, 0
      %p112 = por %p110, %p111
      %s114 = sadd.s32 %s113, 1
      %p117 = scmp.eq.s32.totalorder %s16, 1
      %p118 = scmp.ne.s32.totalorder %s113, %s115
      %p119 = scmp.eq.s32.totalorder %s16, 0
      %p120 = por %p118, %p119
      %p121 = scmp.ne.s32.totalorder %s113, %s115
      %p122 = scmp.eq.s32.totalorder %s21, 1
      %p123 = por %p121, %p122
      %p124 = scmp.ne.s32.totalorder %s115, %s116
      %p125 = scmp.eq.s32.totalorder %s21, 0
      %p126 = por %p124, %p125
      %p127 = scmp.ne.s32.totalorder %s115, %s116
      %p128 = scmp.eq.s32.totalorder %s22, 1
      %p129 = por %p127, %p128
      %p131 = scmp.ne.s32.totalorder %s116, %s130
      %p132 = scmp.eq.s32.totalorder %s22, 0
      %p133 = por %p131, %p132
      %s135 = sadd.s32 %s134, 1
      %p138 = scmp.eq.s32.totalorder %s16, 1
      %p139 = scmp.ne.s32.totalorder %s134, %s136
      %p140 = scmp.eq.s32.totalorder %s16, 0
      %p141 = por %p139, %p140
      %p142 = scmp.ne.s32.totalorder %s134, %s136
      %p143 = scmp.eq.s32.totalorder %s21, 1
      %p144 = por %p142, %p143
      %p145 = scmp.ne.s32.totalorder %s136, %s137
      %p146 = scmp.eq.s32.totalorder %s21, 0
      %p147 = por %p145, %p146
      %p148 = scmp.ne.s32.totalorder %s136, %s137
      %p149 = scmp.eq.s32.totalorder %s22, 1
      %p150 = por %p148, %p149
      %p152 = scmp.ne.s32.totalorder %s137, %s151
      %p153 = scmp.eq.s32.totalorder %s22, 0
      %p154 = por %p152, %p153
      %s156 = sadd.s32 %s155, 1
      %p159 = scmp.eq.s32.totalorder %s16, 1
      %p160 = scmp.ne.s32.totalorder %s155, %s157
      %p161 = scmp.eq.s32.totalorder %s16, 0
      %p162 = por %p160, %p161
      %p163 = scmp.ne.s32.totalorder %s155, %s157
      %p164 = scmp.eq.s32.totalorder %s21, 1
      %p165 = por %p163, %p164
      %p166 = scmp.ne.s32.totalorder %s157, %s158
      %p167 = scmp.eq.s32.totalorder %s21, 0
      %p168 = por %p166, %p167
      %p169 = scmp.ne.s32.totalorder %s157, %s158
      %p170 = scmp.eq.s32.totalorder %s22, 1
      %p171 = por %p169, %p170
      %p173 = scmp.ne.s32.totalorder %s158, %s172
      %p174 = scmp.eq.s32.totalorder %s22, 0
      %p175 = por %p173, %p174
      %s176 = ssub.s32 %s16, %s23
      %p177 = scmp.eq.s32.totalorder %s176, 0
      %s179 = sadd.s32 %s178, 1
      %s180 = scalar_select %p177, %s178, %s179
      %p183 = pneg %p177
      %p184 = scmp.eq.s32.totalorder %s16, 1
      %p185 = por %p183, %p184
      %p186 = scmp.ne.s32.totalorder %s178, %s181
      %p187 = scmp.eq.s32.totalorder %s16, 0
      %p188 = por %p186, %p187
      %p189 = scmp.ne.s32.totalorder %s178, %s181
      %p190 = scmp.eq.s32.totalorder %s21, 1
      %p191 = por %p189, %p190
      %p192 = scmp.ne.s32.totalorder %s181, %s182
      %p193 = scmp.eq.s32.totalorder %s21, 0
      %p194 = por %p192, %p193
      %p195 = scmp.ne.s32.totalorder %s181, %s182
      %p196 = scmp.eq.s32.totalorder %s22, 1
      %p197 = por %p195, %p196
      %p199 = scmp.ne.s32.totalorder %s182, %s198
      %p200 = scmp.eq.s32.totalorder %s22, 0
      %p201 = por %p199, %p200
      %p202 = scmp.le.s32.totalorder 1, %s16
      %p203 = scmp.lt.s32.totalorder %s16, 3
      %p204 = pnand %p202, %p203
      %p205 = pneg %p204
      // Predicated region
      $region9: #{mlp_forward.1} parent=5 // pred_check
        _
      $region10: #{mlp_forward.1} parent=5 // pred_check_branch
        %207 = sbr.rel (%p204) target = $region12
      $region11: #{mlp_forward.1} parent=5 // pred_region
        %s208 = ssub.s32 %s16, 1
        // Predicated region
        $region13: #{mlp_forward.1} parent=11 // pred_check
          %p209 = pneg %p63
        $region14: #{mlp_forward.1} parent=11 // pred_check_branch
          %211 = sbr.rel (%p209) target = $region16
        $region15: #{mlp_forward.1} parent=11 // pred_region
          _
        $region16: #{mlp_forward.1} parent=11 // pred_fallthru
          _
        // Predicated region
        $region17: #{mlp_forward.1} parent=11 // pred_check
          %p212 = pneg %p84
        $region18: #{mlp_forward.1} parent=11 // pred_check_branch
          %214 = sbr.rel (%p212) target = $region20
        $region19: #{mlp_forward.1} parent=11 // pred_region
          _
        $region20: #{mlp_forward.1} parent=11 // pred_fallthru
          _
        // Predicated region
        $region21: #{mlp_forward.1} parent=11 // pred_check
          %p215 = pneg %p105
        $region22: #{mlp_forward.1} parent=11 // pred_check_branch
          %217 = sbr.rel (%p215) target = $region24
        $region23: #{mlp_forward.1} parent=11 // pred_region
          _
        $region24: #{mlp_forward.1} parent=11 // pred_fallthru
          _
        // Predicated region
        $region25: #{mlp_forward.1} parent=11 // pred_check
          %p218 = pneg %p126
        $region26: #{mlp_forward.1} parent=11 // pred_check_branch
          %220 = sbr.rel (%p218) target = $region28
        $region27: #{mlp_forward.1} parent=11 // pred_region
          _
        $region28: #{mlp_forward.1} parent=11 // pred_fallthru
          _
        // Predicated region
        $region29: #{mlp_forward.1} parent=11 // pred_check
          %p221 = pneg %p147
        $region30: #{mlp_forward.1} parent=11 // pred_check_branch
          %223 = sbr.rel (%p221) target = $region32
        $region31: #{mlp_forward.1} parent=11 // pred_region
          _
        $region32: #{mlp_forward.1} parent=11 // pred_fallthru
          _
        // Predicated region
        $region33: #{mlp_forward.1} parent=11 // pred_check
          %p224 = pneg %p168
        $region34: #{mlp_forward.1} parent=11 // pred_check_branch
          %226 = sbr.rel (%p224) target = $region36
        $region35: #{mlp_forward.1} parent=11 // pred_region
          _
        $region36: #{mlp_forward.1} parent=11 // pred_fallthru
          _
      $region12: #{mlp_forward.1} parent=5 // pred_fallthru
        _
      %p227 = scmp.lt.s32.totalorder %s16, 2
      // Predicated region
      $region37: #{mlp_forward.1} parent=5 // pred_check
        %p228 = pneg %p227
      $region38: #{mlp_forward.1} parent=5 // pred_check_branch
        %230 = sbr.rel (%p228) target = $region40
      $region39: #{mlp_forward.1} parent=5 // pred_region
        // Predicated region
        $region41: #{mlp_forward.1} parent=39 // pred_check
          %p231 = pneg %p36
        $region42: #{mlp_forward.1} parent=39 // pred_check_branch
          %233 = sbr.rel (%p231) target = $region44
        $region43: #{mlp_forward.1} parent=39 // pred_region
          %s234 = smul.u32 2, %s16
          %p235 = scmp.lt.s32.totalorder %s234, 3
          %s236 = scalar_select %p235, %s234, 3
          %s237 = smul.addr %s236, 8
          %s238 = scalar_lea.vmem %s0, %s237
          %s239 = smul.u32 2, %s16
        $region44: #{mlp_forward.1} parent=39 // pred_fallthru
          _
      $region40: #{mlp_forward.1} parent=5 // pred_fallthru
        _
      %p240 = scmp.le.s32.totalorder 1, %s16
      %p241 = scmp.lt.s32.totalorder %s16, 3
      %p242 = pnand %p240, %p241
      %p243 = pneg %p242
      // Predicated region
      $region45: #{mlp_forward.1} parent=5 // pred_check
        _
      $region46: #{mlp_forward.1} parent=5 // pred_check_branch
        %245 = sbr.rel (%p242) target = $region48
      $region47: #{mlp_forward.1} parent=5 // pred_region
        %s246 = ssub.s32 %s16, 1
        %s247 = smul.u32 2, %s21
        %p248 = scmp.lt.s32.totalorder %s247, 3
        %s249 = scalar_select %p248, %s247, 3
        %s250 = smul.addr %s249, 8
        %s251 = scalar_lea.vmem %s0, %s250
        %p252 = pneg %p42
        %p253 = pneg %p39
        %p254 = pneg %p63
        %p255 = pneg %p60
        %p256 = pneg %p84
        %p257 = pneg %p81
        %p258 = pneg %p105
        %p259 = pneg %p102
        %p260 = pneg %p126
        %p261 = pneg %p123
        %p262 = pneg %p147
        %p263 = pneg %p144
        %p264 = pneg %p168
        %p265 = pneg %p165
        %p266 = pneg %p194
        %p267 = pneg %p191
        %s268 = sand.u32 %s181, 1
        %s269 = scalar_lea.sflag [#allocation3], %s268
        %s270 = sand.u32 %s181, 1
        %s271 = smul.addr %s270, 8
        %s272 = scalar_lea.vmem [#allocation2], %s271
        %s273 = smul.u32 2, %s21
        %p274 = scmp.lt.s32.totalorder %s273, 3
        %s275 = scalar_select %p274, %s273, 3
        %s276 = smul.addr %s275, 8
        %s277 = scalar_lea.vmem %s0, %s276
        %s278 = smul.u32 2, %s21
        %s279 = smul.u32 2, %s21
        %v280 = vld [vmem:[%s1] sm:$0xff]
        %v281 = vld [vmem:[%s1 + $0x8] sm:$0xff]
        %v282 = vld [vmem:[%s277] sm:$0xff]
        %v283 = vld [vmem:[%s277 + $0x8] sm:$0xff]
        %v284 = vld [vmem:[%s2] sm:$0xff]
        %v285 = vld [vmem:[%s2 + $0x8] sm:$0xff]
        %287 = vset.pattern.permute.xlu0 0
        %288 = vperm.xlu0 %287, %v284
        %v289 = vpop.permute.xlu0 %288
        %292 = vset.pattern.permute.xlu0 0
        %293 = vperm.xlu0 %292, %v285
        %v294 = vpop.permute.xlu0 %293
        %vm296 = vcmask 64512
        %v298 = vsel %vm296, %v280, 0
        %v301 = vsel %vm296, %v281, 0
        %303 = vmatprep.subr.mxu0 %v283
        %304 = vmatpush1.msra.mxu0 %v282
        %305 = vmatprep.subr.mxu0 0.0
        %306 = vmatpush1.msra.mxu0 0.0
        %307 = vmatprep.subr.mxu0 0.0
        %308 = vmatpush1.msra.mxu0 0.0
        %309 = vmatprep.subr.mxu0 0.0
        %310 = vmatpush1.msra.mxu0 0.0
        %311 = vmatprep.subr.mxu0 0.0
        %312 = vmatpush1.msra.mxu0 0.0
        %313 = vmatprep.subr.mxu0 0.0
        %314 = vmatpush1.msra.mxu0 0.0
        %315 = vmatprep.subr.mxu0 0.0
        %316 = vmatpush1.msra.mxu0 0.0
        %317 = vmatprep.subr.mxu0 0.0
        %318 = vmatpush1.msra.mxu0 0.0
        %319 = vmatprep.subr.mxu0 0.0
        %320 = vmatpush1.msra.mxu0 0.0
        %321 = vmatprep.subr.mxu0 0.0
        %322 = vmatpush1.msra.mxu0 0.0
        %323 = vmatprep.subr.mxu0 0.0
        %324 = vmatpush1.msra.mxu0 0.0
        %325 = vmatprep.subr.mxu0 0.0
        %326 = vmatpush1.msra.mxu0 0.0
        %327 = vmatprep.subr.mxu0 0.0
        %328 = vmatpush1.msra.mxu0 0.0
        %329 = vmatprep.subr.mxu0 0.0
        %330 = vmatpush1.msra.mxu0 0.0
        %331 = vmatprep.subr.mxu0 0.0
        %332 = vmatpush1.msra.mxu0 0.0
        %333 = vmatprep.subr.mxu0 0.0
        %334 = vmatpush1.msra.mxu0 0.0
        %335 = vmatprep.subr.mxu0 0.0
        %336 = vmatpush1.msra.mxu0 0.0
        %337 = vmatprep.subr.mxu0 0.0
        %338 = vmatpush1.msra.mxu0 0.0
        %339 = vmatprep.subr.mxu0 0.0
        %340 = vmatpush1.msra.mxu0 0.0
        %341 = vmatprep.subr.mxu0 0.0
        %342 = vmatpush1.msra.mxu0 0.0
        %343 = vmatprep.subr.mxu0 0.0
        %344 = vmatpush1.msra.mxu0 0.0
        %345 = vmatprep.subr.mxu0 0.0
        %346 = vmatpush1.msra.mxu0 0.0
        %347 = vmatprep.subr.mxu0 0.0
        %348 = vmatpush1.msra.mxu0 0.0
        %349 = vmatprep.subr.mxu0 0.0
        %350 = vmatpush1.msra.mxu0 0.0
        %351 = vmatprep.subr.mxu0 0.0
        %352 = vmatpush1.msra.mxu0 0.0
        %353 = vmatprep.subr.mxu0 0.0
        %354 = vmatpush1.msra.mxu0 0.0
        %355 = vmatprep.subr.mxu0 0.0
        %356 = vmatpush1.msra.mxu0 0.0
        %357 = vmatprep.subr.mxu0 0.0
        %358 = vmatpush1.msra.mxu0 0.0
        %359 = vmatprep.subr.mxu0 0.0
        %360 = vmatpush1.msra.mxu0 0.0
        %361 = vmatprep.subr.mxu0 0.0
        %362 = vmatpush1.msra.mxu0 0.0
        %363 = vmatprep.subr.mxu0 0.0
        %364 = vmatpush1.msra.mxu0 0.0
        %365 = vmatprep.subr.mxu0 0.0
        %366 = vmatpush1.msra.mxu0 0.0
        %367 = vmatprep.mubr.f32.mxu0 0.0
        %368 = vmatmul.mubr.f32.gmra.mrb[0].mxu0 %v298
        %v369 = vpop.f32.mrb[0].mxu0
        %v370 = vadd.f32 %v289, %v369
        %v371 = vpop.f32.mrb[0].mxu0
        %v372 = vadd.f32 %v289, %v371
        %373 = vmatprep.mubr.f32.mxu0 0.0
        %374 = vmatmul.mubr.f32.gmra.mrb[0].mxu0 %v301
        %v375 = vpop.f32.mrb[0].mxu0
        %v376 = vadd.f32 %v294, %v375
        %v377 = vpop.f32.mrb[0].mxu0
        %v378 = vadd.f32 %v294, %v377
        %379 = vdwg.mxu0
        %v380 = vxor.u32 %v370, 2147483648
        %v381 = vxor.u32 %v372, 2147483648
        %v382 = vxor.u32 %v376, 2147483648
        %v383 = vxor.u32 %v378, 2147483648
        %v384 = vmul.f32 %v380, 1.442695
        %v385 = vpow.pop %v384
        %v386 = vmul.f32 %v381, 1.442695
        %v387 = vpow.pop %v386
        %v388 = vmul.f32 %v382, 1.442695
        %v389 = vpow.pop %v388
        %v390 = vmul.f32 %v383, 1.442695
        %v391 = vpow.pop %v390
        %v392 = vadd.f32 %v385, 1.0
        %v393 = vadd.f32 %v387, 1.0
        %v394 = vadd.f32 %v389, 1.0
        %v395 = vadd.f32 %v391, 1.0
        %v396 = vrcp.pop %v392
        %v397 = vmul.f32 1.0, %v396
        %v398 = vrcp.pop %v393
        %v399 = vmul.f32 1.0, %v398
        %v400 = vrcp.pop %v394
        %v401 = vmul.f32 1.0, %v400
        %v402 = vrcp.pop %v395
        %v403 = vmul.f32 1.0, %v402
        %v404 = vmul.f32 %v370, %v397
        %v405 = vmul.f32 %v372, %v399
        %v406 = vmul.f32 %v376, %v401
        %v407 = vmul.f32 %v378, %v403
        %v408 = vld [vmem:[%s3] sm:$0xff]
        %v409 = vld [vmem:[%s3 + $0x8] sm:$0xff]
        %v410 = vld [vmem:[%s4] sm:$0xff]
        %v411 = vld [vmem:[%s4 + $0x8] sm:$0xff]
        %413 = vset.pattern.permute.xlu0 0
        %414 = vperm.xlu0 %413, %v410
        %v415 = vpop.permute.xlu0 %414
        %418 = vset.pattern.permute.xlu0 0
        %419 = vperm.xlu0 %418, %v411
        %v420 = vpop.permute.xlu0 %419
        %vm422 = vcmask 130048
        %v424 = vsel %vm422, %v408, 0
        %v427 = vsel %vm422, %v409, 0
        %429 = vmatprep.subr.mxu0 %v405
        %430 = vmatpush1.msra.mxu0 %v404
        %431 = vmatprep.subr.mxu0 %v407
        %432 = vmatpush1.msra.mxu0 %v406
        %433 = vmatprep.subr.mxu0 0.0
        %434 = vmatpush1.msra.mxu0 0.0
        %435 = vmatprep.subr.mxu0 0.0
        %436 = vmatpush1.msra.mxu0 0.0
        %437 = vmatprep.subr.mxu0 0.0
        %438 = vmatpush1.msra.mxu0 0.0
        %439 = vmatprep.subr.mxu0 0.0
        %440 = vmatpush1.msra.mxu0 0.0
        %441 = vmatprep.subr.mxu0 0.0
        %442 = vmatpush1.msra.mxu0 0.0
        %443 = vmatprep.subr.mxu0 0.0
        %444 = vmatpush1.msra.mxu0 0.0
        %445 = vmatprep.subr.mxu0 0.0
        %446 = vmatpush1.msra.mxu0 0.0
        %447 = vmatprep.subr.mxu0 0.0
        %448 = vmatpush1.msra.mxu0 0.0
        %449 = vmatprep.subr.mxu0 0.0
        %450 = vmatpush1.msra.mxu0 0.0
        %451 = vmatprep.subr.mxu0 0.0
        %452 = vmatpush1.msra.mxu0 0.0
        %453 = vmatprep.subr.mxu0 0.0
        %454 = vmatpush1.msra.mxu0 0.0
        %455 = vmatprep.subr.mxu0 0.0
        %456 = vmatpush1.msra.mxu0 0.0
        %457 = vmatprep.subr.mxu0 0.0
        %458 = vmatpush1.msra.mxu0 0.0
        %459 = vmatprep.subr.mxu0 0.0
        %460 = vmatpush1.msra.mxu0 0.0
        %461 = vmatprep.subr.mxu0 0.0
        %462 = vmatpush1.msra.mxu0 0.0
        %463 = vmatprep.subr.mxu0 0.0
        %464 = vmatpush1.msra.mxu0 0.0
        %465 = vmatprep.subr.mxu0 0.0
        %466 = vmatpush1.msra.mxu0 0.0
        %467 = vmatprep.subr.mxu0 0.0
        %468 = vmatpush1.msra.mxu0 0.0
        %469 = vmatprep.subr.mxu0 0.0
        %470 = vmatpush1.msra.mxu0 0.0
        %471 = vmatprep.subr.mxu0 0.0
        %472 = vmatpush1.msra.mxu0 0.0
        %473 = vmatprep.subr.mxu0 0.0
        %474 = vmatpush1.msra.mxu0 0.0
        %475 = vmatprep.subr.mxu0 0.0
        %476 = vmatpush1.msra.mxu0 0.0
        %477 = vmatprep.subr.mxu0 0.0
        %478 = vmatpush1.msra.mxu0 0.0
        %479 = vmatprep.subr.mxu0 0.0
        %480 = vmatpush1.msra.mxu0 0.0
        %481 = vmatprep.subr.mxu0 0.0
        %482 = vmatpush1.msra.mxu0 0.0
        %483 = vmatprep.subr.mxu0 0.0
        %484 = vmatpush1.msra.mxu0 0.0
        %485 = vmatprep.subr.mxu0 0.0
        %486 = vmatpush1.msra.mxu0 0.0
        %487 = vmatprep.subr.mxu0 0.0
        %488 = vmatpush1.msra.mxu0 0.0
        %489 = vmatprep.subr.mxu0 0.0
        %490 = vmatpush1.msra.mxu0 0.0
        %491 = vmatprep.subr.mxu0 0.0
        %492 = vmatpush1.msra.mxu0 0.0
        %493 = vmatprep.mubr.f32.mxu0 0.0
        %494 = vmatmul.mubr.f32.gmra.mrb[0].mxu0 %v424
        %v495 = vpop.f32.mrb[0].mxu0
        %v496 = vadd.f32 %v415, %v495
        %v497 = vpop.f32.mrb[0].mxu0
        %v498 = vadd.f32 %v415, %v497
        %499 = vmatprep.mubr.f32.mxu0 0.0
        %500 = vmatmul.mubr.f32.gmra.mrb[0].mxu0 %v427
        %v501 = vpop.f32.mrb[0].mxu0
        %v502 = vadd.f32 %v420, %v501
        %v503 = vpop.f32.mrb[0].mxu0
        %v504 = vadd.f32 %v420, %v503
        %505 = vdwg.mxu0
        %v506 = vxor.u32 %v496, 2147483648
        %v507 = vxor.u32 %v498, 2147483648
        %v508 = vxor.u32 %v502, 2147483648
        %v509 = vxor.u32 %v504, 2147483648
        %v510 = vmul.f32 %v506, 1.442695
        %v511 = vpow.pop %v510
        %v512 = vmul.f32 %v507, 1.442695
        %v513 = vpow.pop %v512
        %v514 = vmul.f32 %v508, 1.442695
        %v515 = vpow.pop %v514
        %v516 = vmul.f32 %v509, 1.442695
        %v517 = vpow.pop %v516
        %v518 = vadd.f32 %v511, 1.0
        %v519 = vadd.f32 %v513, 1.0
        %v520 = vadd.f32 %v515, 1.0
        %v521 = vadd.f32 %v517, 1.0
        %v522 = vrcp.pop %v518
        %v523 = vmul.f32 1.0, %v522
        %v524 = vrcp.pop %v519
        %v525 = vmul.f32 1.0, %v524
        %v526 = vrcp.pop %v520
        %v527 = vmul.f32 1.0, %v526
        %v528 = vrcp.pop %v521
        %v529 = vmul.f32 1.0, %v528
        %v530 = vmul.f32 %v496, %v523
        %v531 = vmul.f32 %v498, %v525
        %v532 = vmul.f32 %v502, %v527
        %v533 = vmul.f32 %v504, %v529
        %v534 = vld [vmem:[%s5] sm:$0xf]
        %v535 = vld [vmem:[%s6] sm:$0xf]
        %537 = vset.pattern.permute.xlu0 0
        %538 = vperm.xlu0 %537, %v535
        %v539 = vpop.permute.xlu0 %538
        %v542 = vsel %vm422, %v534, 0
        %544 = vmatprep.subr.mxu0 %v531
        %545 = vmatpush1.msra.mxu0 %v530
        %546 = vmatprep.subr.mxu0 %v533
        %547 = vmatpush1.msra.mxu0 %v532
        %548 = vmatprep.subr.mxu0 0.0
        %549 = vmatpush1.msra.mxu0 0.0
        %550 = vmatprep.subr.mxu0 0.0
        %551 = vmatpush1.msra.mxu0 0.0
        %552 = vmatprep.subr.mxu0 0.0
        %553 = vmatpush1.msra.mxu0 0.0
        %554 = vmatprep.subr.mxu0 0.0
        %555 = vmatpush1.msra.mxu0 0.0
        %556 = vmatprep.subr.mxu0 0.0
        %557 = vmatpush1.msra.mxu0 0.0
        %558 = vmatprep.subr.mxu0 0.0
        %559 = vmatpush1.msra.mxu0 0.0
        %560 = vmatprep.subr.mxu0 0.0
        %561 = vmatpush1.msra.mxu0 0.0
        %562 = vmatprep.subr.mxu0 0.0
        %563 = vmatpush1.msra.mxu0 0.0
        %564 = vmatprep.subr.mxu0 0.0
        %565 = vmatpush1.msra.mxu0 0.0
        %566 = vmatprep.subr.mxu0 0.0
        %567 = vmatpush1.msra.mxu0 0.0
        %568 = vmatprep.subr.mxu0 0.0
        %569 = vmatpush1.msra.mxu0 0.0
        %570 = vmatprep.subr.mxu0 0.0
        %571 = vmatpush1.msra.mxu0 0.0
        %572 = vmatprep.subr.mxu0 0.0
        %573 = vmatpush1.msra.mxu0 0.0
        %574 = vmatprep.subr.mxu0 0.0
        %575 = vmatpush1.msra.mxu0 0.0
        %576 = vmatprep.subr.mxu0 0.0
        %577 = vmatpush1.msra.mxu0 0.0
        %578 = vmatprep.subr.mxu0 0.0
        %579 = vmatpush1.msra.mxu0 0.0
        %580 = vmatprep.subr.mxu0 0.0
        %581 = vmatpush1.msra.mxu0 0.0
        %582 = vmatprep.subr.mxu0 0.0
        %583 = vmatpush1.msra.mxu0 0.0
        %584 = vmatprep.subr.mxu0 0.0
        %585 = vmatpush1.msra.mxu0 0.0
        %586 = vmatprep.subr.mxu0 0.0
        %587 = vmatpush1.msra.mxu0 0.0
        %588 = vmatprep.subr.mxu0 0.0
        %589 = vmatpush1.msra.mxu0 0.0
        %590 = vmatprep.subr.mxu0 0.0
        %591 = vmatpush1.msra.mxu0 0.0
        %592 = vmatprep.subr.mxu0 0.0
        %593 = vmatpush1.msra.mxu0 0.0
        %594 = vmatprep.subr.mxu0 0.0
        %595 = vmatpush1.msra.mxu0 0.0
        %596 = vmatprep.subr.mxu0 0.0
        %597 = vmatpush1.msra.mxu0 0.0
        %598 = vmatprep.subr.mxu0 0.0
        %599 = vmatpush1.msra.mxu0 0.0
        %600 = vmatprep.subr.mxu0 0.0
        %601 = vmatpush1.msra.mxu0 0.0
        %602 = vmatprep.subr.mxu0 0.0
        %603 = vmatpush1.msra.mxu0 0.0
        %604 = vmatprep.subr.mxu0 0.0
        %605 = vmatpush1.msra.mxu0 0.0
        %606 = vmatprep.subr.mxu0 0.0
        %607 = vmatpush1.msra.mxu0 0.0
        %608 = vmatprep.mubr.f32.mxu0 0.0
        %609 = vmatmul.mubr.f32.gmra.mrb[0].mxu0 %v542
        %v610 = vpop.f32.mrb[0].mxu0
        %v611 = vadd.f32 %v539, %v610
        %v612 = vpop.f32.mrb[0].mxu0
        %v613 = vadd.f32 %v539, %v612
        %614 = vdwg.mxu0
        %v617 = vcombine.low %v611, %v613
        %619 = vst [vmem:[%s272] sm:$0xff] %v617
        %s620 = sand.u32 %s181, 1
        %s621 = scalar_lea.sflag [#allocation3], %s620
        %s622 = sand.u32 %s181, 1
        %s623 = smul.addr %s622, 8
        %s624 = scalar_lea.vmem [#allocation2], %s623
        // Predicated region
        $region49: #{mlp_forward.1} parent=47 // pred_check
          %p625 = pneg %p191
        $region50: #{mlp_forward.1} parent=47 // pred_check_branch
          %627 = sbr.rel (%p625) target = $region52
        $region51: #{mlp_forward.1} parent=47 // pred_region
          %s628 = smul.u32 2, %s21
          %s630 = ssub.s32 128, 128
          %631 = vsyncadd %s621, %s630
          %s632 = smul.addr %s628, 64
          %s633 = scalar_lea.hbm %s7, %s632
          %s635 = sshll.u32 %s624, 4
          %s636 = int_to_ptr.vmem [resolvable:$true] %s635
          %638 = dma.vmem_to_hbm [thread:$0]  %s636, 128, %s633, %s621
        $region52: #{mlp_forward.1} parent=47 // pred_fallthru
          _
      $region48: #{mlp_forward.1} parent=5 // pred_fallthru
        _
      %p639 = scmp.le.s32.totalorder 2, %s16
      // Predicated region
      $region53: #{mlp_forward.1} parent=5 // pred_check
        %p640 = pneg %p639
      $region54: #{mlp_forward.1} parent=5 // pred_check_branch
        %642 = sbr.rel (%p640) target = $region56
      $region55: #{mlp_forward.1} parent=5 // pred_region
        %s643 = ssub.s32 %s16, 2
        // Predicated region
        $region57: #{mlp_forward.1} parent=55 // pred_check
          %p644 = pneg %p197
        $region58: #{mlp_forward.1} parent=55 // pred_check_branch
          %646 = sbr.rel (%p644) target = $region60
        $region59: #{mlp_forward.1} parent=55 // pred_region
          %s647 = sand.u32 %s182, 1
          %s648 = scalar_lea.sflag [#allocation3], %s647
          %s649 = sand.u32 %s182, 1
          %s650 = smul.addr %s649, 8
          %s651 = scalar_lea.vmem [#allocation2], %s650
          %652 = dma.done %s648, 128
        $region60: #{mlp_forward.1} parent=55 // pred_fallthru
          _
      $region56: #{mlp_forward.1} parent=5 // pred_fallthru
        _
    $region6: #{mlp_forward.1} parent=1 // loop_footer
      %s20 = sadd.s32 1, %s16
    $region7: #{mlp_forward.1} parent=1 // loop_footer_branch
      %15 = sbr.rel target = $region3
    $region8: #{mlp_forward.1} parent=1 // loop_exit
      _
    %653 = vsyncpa [#allocation3], 1
    %s654 = scalar_lea.sflag [#allocation3], 1
    %655 = vsyncpa %s654, 1

</llo_original>
